<compile_context>
chip_gen: v5e
topology: v5e:2x2
jax: 0.10.0
libtpu: 0.0.40
codegen_flags: <defaults>
</compile_context>

<pallas_src>
import functools

import jax
import jax.numpy as jnp
from jax.experimental import pallas as pl
from jax.experimental.pallas import tpu as pltpu

_SMALL_DIM = 8      # use the VPU batch-on-lanes path when I <= 8 and O <= 8
_LANES_TB = 1024    # max batch tile (lane columns) per grid step, lanes path
_MXU_TB = 256       # max batch tile (rows) per grid step, MXU path


def _round_up(x, m):
    return ((x + m - 1) // m) * m


# --------------- batch-on-lanes kernel (I <= 8 and O <= 8) -------------------
def _fourier_kernel_lanes(t_ref, ws_ref, wc_ref, wos_ref, woc_ref, bo_ref, o_ref):
    # t_ref:   (I, TB)   batch on the lane axis
    # ws_ref:  (H, I)    sin-branch weight (PyTorch [out, in] layout)
    # wc_ref:  (H, I)    cos-branch weight
    # wos_ref: (H, O)    sin half of W_out, transposed
    # woc_ref: (H, O)    cos half of W_out, transposed
    # bo_ref:  (O, 1)
    # o_ref:   (O, TB)
    I = t_ref.shape[0]
    O = o_ref.shape[0]

    t = t_ref[...]
    ws = ws_ref[...]
    wc = wc_ref[...]

    # Unrolled K=I contraction as VPU outer products: (H,1)*(1,TB) -> (H,TB).
    sin_lin = ws[:, 0:1] * t[0:1, :]
    cos_lin = wc[:, 0:1] * t[0:1, :]
    for k in range(1, I):
        sin_lin = sin_lin + ws[:, k:k + 1] * t[k:k + 1, :]
        cos_lin = cos_lin + wc[:, k:k + 1] * t[k:k + 1, :]

    s = jnp.sin(sin_lin)          # (H, TB)  EUP
    c = jnp.cos(cos_lin)          # (H, TB)

    wos = wos_ref[...]
    woc = woc_ref[...]
    bo = bo_ref[...]
    for o in range(O):            # N=O contraction: VPU multiply + sublane reduce
        prod = wos[:, o:o + 1] * s + woc[:, o:o + 1] * c        # (H, TB)
        row = jnp.sum(prod, axis=0, keepdims=True) + bo[o:o + 1, :]   # (1, TB)
        o_ref[pl.ds(o, 1), :] = row.astype(o_ref.dtype)


# ---------------------- general MXU kernel (I > 8 or O > 8) -------------------
def _fourier_kernel_mxu(t_ref, ws_ref, wc_ref, wos_ref, woc_ref, bo_ref, o_ref):
    # t_ref:   (TB, I)
    # ws_ref:  (I, H)    pre-transposed to [in, out]
    # wc_ref:  (I, H)
    # wos_ref: (H, O)    sin half of W_out, transposed
    # woc_ref: (H, O)    cos half of W_out, transposed
    # bo_ref:  (1, O)
    # o_ref:   (TB, O)
    t = t_ref[...]
    s = jnp.sin(jnp.dot(t, ws_ref[...], preferred_element_type=jnp.float32))
    c = jnp.cos(jnp.dot(t, wc_ref[...], preferred_element_type=jnp.float32))
    out = (jnp.dot(s, wos_ref[...], preferred_element_type=jnp.float32)
           + jnp.dot(c, woc_ref[...], preferred_element_type=jnp.float32)
           + bo_ref[...])
    o_ref[...] = out.astype(o_ref.dtype)


# ------------------------------- wrappers -------------------------------------
def _forward_lanes(t, ws, wc, wos, woc, bo):
    B, I = t.shape
    H, O = wos.shape

    B_pad = _round_up(B, 128)
    TB = min(_LANES_TB, B_pad)
    B_pad = _round_up(B_pad, TB)
    t_T = jnp.pad(jnp.transpose(t), ((0, 0), (0, B_pad - B)))   # (I, B_pad)

    flops = B_pad * H * (4 * I + 5 * O)
    bytes_accessed = 4 * (I * B_pad + O * B_pad + 2 * H * I + 2 * H * O + O)

    out_T = pl.pallas_call(
        _fourier_kernel_lanes,
        out_shape=jax.ShapeDtypeStruct((O, B_pad), jnp.float32),
        grid=(B_pad // TB,),
        in_specs=[
            pl.BlockSpec((I, TB), lambda i: (0, i)),   # batch-tiled input
            pl.BlockSpec((H, I), lambda i: (0, 0)),    # resident weights
            pl.BlockSpec((H, I), lambda i: (0, 0)),
            pl.BlockSpec((H, O), lambda i: (0, 0)),
            pl.BlockSpec((H, O), lambda i: (0, 0)),
            pl.BlockSpec((O, 1), lambda i: (0, 0)),
        ],
        out_specs=pl.BlockSpec((O, TB), lambda i: (0, i)),
        compiler_params=pltpu.CompilerParams(dimension_semantics=("parallel",)),
        cost_estimate=pl.CostEstimate(flops=flops,
                                      transcendentals=2 * B_pad * H,
                                      bytes_accessed=bytes_accessed),
    )(t_T, ws, wc, wos, woc, bo)
    return jnp.transpose(out_T[:, :B])                 # (B, O)


def _forward_mxu(t, ws_t, wc_t, wos, woc, bo):
    B, I = t.shape
    H, O = wos.shape

    B_pad = _round_up(B, 8)
    TB = min(_MXU_TB, B_pad)
    B_pad = _round_up(B_pad, TB)
    t_p = jnp.pad(t, ((0, B_pad - B), (0, 0)))         # (B_pad, I)

    flops = B_pad * (4 * I * H + 4 * H * O + O)
    bytes_accessed = 4 * (I * B_pad + O * B_pad + 2 * H * I + 2 * H * O + O)

    out = pl.pallas_call(
        _fourier_kernel_mxu,
        out_shape=jax.ShapeDtypeStruct((B_pad, O), jnp.float32),
        grid=(B_pad // TB,),
        in_specs=[
            pl.BlockSpec((TB, I), lambda i: (i, 0)),   # batch-tiled input
            pl.BlockSpec((I, H), lambda i: (0, 0)),    # resident weights
            pl.BlockSpec((I, H), lambda i: (0, 0)),
            pl.BlockSpec((H, O), lambda i: (0, 0)),
            pl.BlockSpec((H, O), lambda i: (0, 0)),
            pl.BlockSpec((1, O), lambda i: (0, 0)),
        ],
        out_specs=pl.BlockSpec((TB, O), lambda i: (i, 0)),
        compiler_params=pltpu.CompilerParams(dimension_semantics=("parallel",)),
        cost_estimate=pl.CostEstimate(flops=flops,
                                      transcendentals=2 * B_pad * H,
                                      bytes_accessed=bytes_accessed),
    )(t_p, ws_t, wc_t, wos, woc, bo)
    return out[:B]


def prepare_params(w_sin, w_cos, w_out, b_out):
    """One-time parameter re-layout (hoisted out of the per-call path).

    w_sin/w_cos: (H, I) PyTorch Linear weights; w_out: (O, 2H); b_out: (O,).
    """
    H, I = w_sin.shape
    O = w_out.shape[0]

    wo_sin_t = jnp.transpose(w_out[:, :H])             # (H, O)  sin half
    wo_cos_t = jnp.transpose(w_out[:, H:])             # (H, O)  cos half

    if I <= _SMALL_DIM and O <= _SMALL_DIM:
        ws = jnp.asarray(w_sin)                        # (H, I)  lanes path
        wc = jnp.asarray(w_cos)
        bo = b_out.reshape(O, 1)
    else:
        ws = jnp.transpose(w_sin)                      # (I, H)  MXU path
        wc = jnp.transpose(w_cos)
        bo = b_out.reshape(1, O)
    return ws, wc, wo_sin_t, wo_cos_t, bo


@jax.jit
def nn_fourier_forward(t, ws, wc, wos, woc, bo):
    """t: (B, I); remaining args are the prepared params from prepare_params()."""
    I = t.shape[1]
    O = wos.shape[1]
    if I <= _SMALL_DIM and O <= _SMALL_DIM:
        return _forward_lanes(t, ws, wc, wos, woc, bo)
    return _forward_mxu(t, ws, wc, wos, woc, bo)


# ------------------------------ test helpers ----------------------------------
def _torch_linear_init(key, out_features, in_features, with_bias):
    """Deterministic stand-in for nn.Linear default init (uniform +-1/sqrt(fan_in))."""
    kw, kb = jax.random.split(key)
    bound = 1.0 / jnp.sqrt(jnp.float32(in_features))
    w = jax.random.uniform(kw, (out_features, in_features), jnp.float32,
                           minval=-bound, maxval=bound)
    if with_bias:
        b = jax.random.uniform(kb, (out_features,), jnp.float32,
                               minval=-bound, maxval=bound)
        return w, b
    return w, None


def _reference(t, w_sin, w_cos, w_out, b_out):
    sin = jnp.sin(t @ w_sin.T)
    cos = jnp.cos(t @ w_cos.T)
    return jnp.concatenate([sin, cos], axis=1) @ w_out.T + b_out


def _run_case(key, n_in, n_out, n_hidden, batch):
    k_t, k_sin, k_cos, k_out = jax.random.split(key, 4)
    w_sin, _ = _torch_linear_init(k_sin, n_hidden, n_in, False)
    w_cos, _ = _torch_linear_init(k_cos, n_hidden, n_in, False)
    w_out, b_out = _torch_linear_init(k_out, n_out, 2 * n_hidden, True)
    t = jax.random.normal(k_t, (batch, n_in), jnp.float32)

    params = prepare_params(w_sin, w_cos, w_out, b_out)
    out = jax.block_until_ready(nn_fourier_forward(t, *params))
    ref = _reference(t, w_sin, w_cos, w_out, b_out)
    assert out.shape == (batch, n_out)
    assert jnp.allclose(out, ref, atol=1e-5, rtol=1e-5)
    return out


if __name__ == "__main__":
    # TODO(synk): the torch.print(output.shape) inside forward() is done host-side here.
    key = jax.random.PRNGKey(0)
    k0, k1, k2 = jax.random.split(key, 3)

    # Default module config: n_in=1, n_out=1, n_hidden=32 (batch-on-lanes VPU path).
    out = _run_case(k0, n_in=1, n_out=1, n_hidden=32, batch=8)
    print(out.shape)   # mirrors print(output.shape) in the PyTorch forward

    # Small multi-dim config: exercises the unrolled I=4 MAC / O=4 per-column reduce.
    _run_case(k1, n_in=4, n_out=4, n_hidden=32, batch=8)

    # Larger config: exercises the general MXU path (I > 8, O > 8) with batch padding.
    _run_case(k2, n_in=16, n_out=16, n_hidden=64, batch=20)

    print("KERNEL_OK")
</pallas_src>

<mosaic_0001>
module attributes {stable_mosaic.version = 11 : i64} {
  func.func @_fourier_kernel_lanes(%arg0: i32, %arg1: memref<1x128xf32, #tpu.memory_space<vmem>>, %arg2: memref<32x1xf32, #tpu.memory_space<vmem>>, %arg3: memref<32x1xf32, #tpu.memory_space<vmem>>, %arg4: memref<32x1xf32, #tpu.memory_space<vmem>>, %arg5: memref<32x1xf32, #tpu.memory_space<vmem>>, %arg6: memref<1x1xf32, #tpu.memory_space<vmem>>, %arg7: memref<1x128xf32, #tpu.memory_space<vmem>>) attributes {dimension_semantics = [#tpu.dimension_semantics<parallel>], iteration_bounds = array<i64: 1>, scalar_prefetch = 0 : i64, scratch_operands = 0 : i64, tpu.core_type = #tpu.core_type<tc>, window_params = [{transform_indices = @transform_0, window_bounds = array<i64: 1, 128>}, {pipeline_mode = #tpu.pipeline_mode<synchronous>, transform_indices = @transform_1, window_bounds = array<i64: 32, 1>}, {pipeline_mode = #tpu.pipeline_mode<synchronous>, transform_indices = @transform_2, window_bounds = array<i64: 32, 1>}, {pipeline_mode = #tpu.pipeline_mode<synchronous>, transform_indices = @transform_3, window_bounds = array<i64: 32, 1>}, {pipeline_mode = #tpu.pipeline_mode<synchronous>, transform_indices = @transform_4, window_bounds = array<i64: 32, 1>}, {pipeline_mode = #tpu.pipeline_mode<synchronous>, transform_indices = @transform_5, window_bounds = array<i64: 1, 1>}, {transform_indices = @transform_6, window_bounds = array<i64: 1, 128>}]} {
    %c0 = arith.constant 0 : index
    %c0_0 = arith.constant 0 : index
    %0 = vector.load %arg1[%c0, %c0_0] : memref<1x128xf32, #tpu.memory_space<vmem>>, vector<1x128xf32>
    %c0_1 = arith.constant 0 : index
    %c0_2 = arith.constant 0 : index
    %1 = vector.load %arg2[%c0_1, %c0_2] : memref<32x1xf32, #tpu.memory_space<vmem>>, vector<32x1xf32>
    %c0_3 = arith.constant 0 : index
    %c0_4 = arith.constant 0 : index
    %2 = vector.load %arg3[%c0_3, %c0_4] : memref<32x1xf32, #tpu.memory_space<vmem>>, vector<32x1xf32>
    %3 = vector.broadcast %1 : vector<32x1xf32> to vector<32x128xf32>
    %4 = vector.broadcast %0 : vector<1x128xf32> to vector<32x128xf32>
    %5 = arith.mulf %3, %4 : vector<32x128xf32>
    %6 = vector.broadcast %2 : vector<32x1xf32> to vector<32x128xf32>
    %7 = vector.broadcast %0 : vector<1x128xf32> to vector<32x128xf32>
    %8 = arith.mulf %6, %7 : vector<32x128xf32>
    %9 = math.sin %5 : vector<32x128xf32>
    %10 = math.cos %8 : vector<32x128xf32>
    %c0_5 = arith.constant 0 : index
    %c0_6 = arith.constant 0 : index
    %11 = vector.load %arg4[%c0_5, %c0_6] : memref<32x1xf32, #tpu.memory_space<vmem>>, vector<32x1xf32>
    %c0_7 = arith.constant 0 : index
    %c0_8 = arith.constant 0 : index
    %12 = vector.load %arg5[%c0_7, %c0_8] : memref<32x1xf32, #tpu.memory_space<vmem>>, vector<32x1xf32>
    %c0_9 = arith.constant 0 : index
    %c0_10 = arith.constant 0 : index
    %13 = vector.load %arg6[%c0_9, %c0_10] : memref<1x1xf32, #tpu.memory_space<vmem>>, vector<1x1xf32>
    %14 = vector.broadcast %11 : vector<32x1xf32> to vector<32x128xf32>
    %15 = arith.mulf %14, %9 : vector<32x128xf32>
    %16 = vector.broadcast %12 : vector<32x1xf32> to vector<32x128xf32>
    %17 = arith.mulf %16, %10 : vector<32x128xf32>
    %18 = arith.addf %15, %17 : vector<32x128xf32>
    %cst = arith.constant dense<0.000000e+00> : vector<128xf32>
    %19 = vector.multi_reduction <add>, %18, %cst [0] : vector<32x128xf32> to vector<128xf32>
    %20 = vector.shape_cast %19 : vector<128xf32> to vector<1x128xf32>
    %21 = vector.broadcast %13 : vector<1x1xf32> to vector<1x128xf32>
    %22 = arith.addf %20, %21 : vector<1x128xf32>
    %c0_11 = arith.constant 0 : index
    %c0_12 = arith.constant 0 : index
    %23 = vector.load %arg7[%c0_11, %c0_12] : memref<1x128xf32, #tpu.memory_space<vmem>>, vector<1x128xf32>
    tpu.vector_store %arg7[%c0_11, %c0_12], %22 {strides = array<i32>} : memref<1x128xf32, #tpu.memory_space<vmem>>, vector<1x128xf32>,
    return
  }
  func.func @transform_0(%arg0: i32) -> (i32, i32) {
    %c0_i32 = arith.constant 0 : i32
    %c0_i32_0 = arith.constant 0 : i32
    return %c0_i32, %arg0 : i32, i32
  }
  func.func @transform_1(%arg0: i32) -> (i32, i32) {
    %c0_i32 = arith.constant 0 : i32
    %c0_i32_0 = arith.constant 0 : i32
    %c0_i32_1 = arith.constant 0 : i32
    return %c0_i32, %c0_i32_0 : i32, i32
  }
  func.func @transform_2(%arg0: i32) -> (i32, i32) {
    %c0_i32 = arith.constant 0 : i32
    %c0_i32_0 = arith.constant 0 : i32
    %c0_i32_1 = arith.constant 0 : i32
    return %c0_i32, %c0_i32_0 : i32, i32
  }
  func.func @transform_3(%arg0: i32) -> (i32, i32) {
    %c0_i32 = arith.constant 0 : i32
    %c0_i32_0 = arith.constant 0 : i32
    %c0_i32_1 = arith.constant 0 : i32
    return %c0_i32, %c0_i32_0 : i32, i32
  }
  func.func @transform_4(%arg0: i32) -> (i32, i32) {
    %c0_i32 = arith.constant 0 : i32
    %c0_i32_0 = arith.constant 0 : i32
    %c0_i32_1 = arith.constant 0 : i32
    return %c0_i32, %c0_i32_0 : i32, i32
  }
  func.func @transform_5(%arg0: i32) -> (i32, i32) {
    %c0_i32 = arith.constant 0 : i32
    %c0_i32_0 = arith.constant 0 : i32
    %c0_i32_1 = arith.constant 0 : i32
    return %c0_i32, %c0_i32_0 : i32, i32
  }
  func.func @transform_6(%arg0: i32) -> (i32, i32) {
    %c0_i32 = arith.constant 0 : i32
    %c0_i32_0 = arith.constant 0 : i32
    return %c0_i32, %arg0 : i32, i32
  }
}

</mosaic_0001>

<llo_original>
// kernel: nn_fourier_forward.1
$region0: #{nn_fourier_forward.1}
  #allocation0 [shape = 'u32[]', space=smem, size = 0x4, offset = 0x4, fixed_abs, tag = 'smem constant byte address 0x4 - core index']
  #allocation1 [shape = 'u32[72,128]{1,0:T(1,128)}', space=vmem, size = 0x9000, scoped, tag = 'internal scratch']
  #allocation2 [shape = 'f32[1,1]{1,0:T(1,128)S(1)}', space=vmem, size = 0x200, scoped, tag = 'scoped memory for nn_fourier_forward.1']
  %s0 = inlined_call_operand.vmem [shape: f32[1,128], index: 0, kind: input, shape index: {}]
  %s1 = inlined_call_operand.vmem [shape: f32[32,1], index: 1, kind: input, shape index: {}]
  %s2 = inlined_call_operand.vmem [shape: f32[32,1], index: 2, kind: input, shape index: {}]
  %s3 = inlined_call_operand.vmem [shape: f32[32,1], index: 3, kind: input, shape index: {}]
  %s4 = inlined_call_operand.vmem [shape: f32[32,1], index: 4, kind: input, shape index: {}]
  %s5 = inlined_call_operand.<no memory space> [shape: f32[1,1], index: 5, kind: input, shape index: {}]
  %s6 = inlined_call_operand.vmem [shape: f32[1,128], index: 6, kind: output, shape index: {}]
  %s7 = sld [smem:[#allocation0]]
  $region34: #{nn_fourier_forward.1} parent=0
    _
  %s9 = ssub.s32 1, %s7
  %s10 = scalar_select 0, %s9, %s7
  %v11 = vstv %s5
  %12 = vst [vmem:[#allocation2] sm:$0x1] %v11
  // Predicated region
  $region2: #{nn_fourier_forward.1} parent=0 // pred_check
    _
  $region3: #{nn_fourier_forward.1} parent=0 // pred_check_branch
    %14 = sbr.rel (0) target = $region5
  $region4: #{nn_fourier_forward.1} parent=0 // pred_region
    _
  $region5: #{nn_fourier_forward.1} parent=0 // pred_fallthru
    _
  // Predicated region
  $region6: #{nn_fourier_forward.1} parent=0 // pred_check
    _
  $region7: #{nn_fourier_forward.1} parent=0 // pred_check_branch
    %16 = sbr.rel (0) target = $region9
  $region8: #{nn_fourier_forward.1} parent=0 // pred_region
    _
  $region9: #{nn_fourier_forward.1} parent=0 // pred_fallthru
    _
  // Predicated region
  $region10: #{nn_fourier_forward.1} parent=0 // pred_check
    _
  $region11: #{nn_fourier_forward.1} parent=0 // pred_check_branch
    %18 = sbr.rel (0) target = $region13
  $region12: #{nn_fourier_forward.1} parent=0 // pred_region
    _
  $region13: #{nn_fourier_forward.1} parent=0 // pred_fallthru
    _
  // Predicated region
  $region14: #{nn_fourier_forward.1} parent=0 // pred_check
    _
  $region15: #{nn_fourier_forward.1} parent=0 // pred_check_branch
    %20 = sbr.rel (0) target = $region17
  $region16: #{nn_fourier_forward.1} parent=0 // pred_region
    _
  $region17: #{nn_fourier_forward.1} parent=0 // pred_fallthru
    _
  // Predicated region
  $region18: #{nn_fourier_forward.1} parent=0 // pred_check
    _
  $region19: #{nn_fourier_forward.1} parent=0 // pred_check_branch
    %22 = sbr.rel (0) target = $region21
  $region20: #{nn_fourier_forward.1} parent=0 // pred_region
    _
  $region21: #{nn_fourier_forward.1} parent=0 // pred_fallthru
    _
  // Predicated region
  $region22: #{nn_fourier_forward.1} parent=0 // pred_check
    _
  $region23: #{nn_fourier_forward.1} parent=0 // pred_check_branch
    %24 = sbr.rel (0) target = $region25
  $region24: #{nn_fourier_forward.1} parent=0 // pred_region
    _
  $region25: #{nn_fourier_forward.1} parent=0 // pred_fallthru
    _
  %v25 = vld [vmem:[%s0] sm:$0x1]
  %v26 = vld [vmem:[%s1] sm:$0xff]
  %v27 = vld [vmem:[%s1 + $0x8] sm:$0xff]
  %v28 = vld [vmem:[%s1 + $0x10] sm:$0xff]
  %v29 = vld [vmem:[%s1 + $0x18] sm:$0xff]
  %v30 = vld [vmem:[%s2] sm:$0xff]
  %v31 = vld [vmem:[%s2 + $0x8] sm:$0xff]
  %v32 = vld [vmem:[%s2 + $0x10] sm:$0xff]
  %v33 = vld [vmem:[%s2 + $0x18] sm:$0xff]
  %35 = vset.pattern.permute.xlu0 0
  %36 = vperm.xlu0 %35, %v26
  %v37 = vpop.permute.xlu0 %36
  %40 = vset.pattern.permute.xlu0 0
  %41 = vperm.xlu0 %40, %v27
  %v42 = vpop.permute.xlu0 %41
  %45 = vset.pattern.permute.xlu0 0
  %46 = vperm.xlu0 %45, %v28
  %v47 = vpop.permute.xlu0 %46
  %50 = vset.pattern.permute.xlu0 0
  %51 = vperm.xlu0 %50, %v29
  %v52 = vpop.permute.xlu0 %51
  %v55 = vperm.slane %v25, 0
  %v57 = vmul.f32 %v37, %v55
  %v58 = vmul.f32 %v42, %v55
  %v59 = vmul.f32 %v47, %v55
  %v60 = vmul.f32 %v52, %v55
  %62 = vset.pattern.permute.xlu0 0
  %63 = vperm.xlu0 %62, %v30
  %v64 = vpop.permute.xlu0 %63
  %67 = vset.pattern.permute.xlu0 0
  %68 = vperm.xlu0 %67, %v31
  %v69 = vpop.permute.xlu0 %68
  %72 = vset.pattern.permute.xlu0 0
  %73 = vperm.xlu0 %72, %v32
  %v74 = vpop.permute.xlu0 %73
  %77 = vset.pattern.permute.xlu0 0
  %78 = vperm.xlu0 %77, %v33
  %v79 = vpop.permute.xlu0 %78
  %v81 = vmul.f32 %v64, %v55
  %v82 = vmul.f32 %v69, %v55
  %v83 = vmul.f32 %v74, %v55
  %v84 = vmul.f32 %v79, %v55
  %v85 = vand.u32 2147483647, %v57
  %vm86 = vcmp.le.f32.partialorder %v85, 0.7853982
  %vm87 = vcmp.lt.s32.totalorder %v57, 0
  %v88 = vand.u32 %v57, 2139095040
  %v89 = vshrl.u32 %v88, 23
  %v90 = vsub.s32 %v89, 127
  %v91 = vand.u32 2147483647, %v57
  %v92 = vand.u32 %v91, 8388607
  %v93 = vor.u32 %v92, 8388608
  %v94 = vsub.s32 0, %v93
  %v95 = vadd.s32 %v90, 1
  %vm96 = vcmp.gt.s32.totalorder %v95, 0
  %v97 = vsel %vm96, %v95, 0
  %v98 = vshrl.u32 %v97, 5
  %v99 = vand.u32 %v97, 31
  %v100 = vsub.s32 32, %v99
  %v101 = vshrl.u32 683565275, %v100
  %v102 = vshll.u32 683565275, %v99
  %v103 = vshrl.u32 2475754826, %v100
  %v104 = vor.u32 %v102, %v103
  %v105 = vshll.u32 2475754826, %v99
  %v106 = vshrl.u32 2131351028, %v100
  %v107 = vor.u32 %v105, %v106
  %v108 = vshll.u32 2131351028, %v99
  %v109 = vshrl.u32 2102212464, %v100
  %v110 = vor.u32 %v108, %v109
  %v111 = vshll.u32 2102212464, %v99
  %v112 = vshrl.u32 920167782, %v100
  %v113 = vor.u32 %v111, %v112
  %v114 = vshll.u32 920167782, %v99
  %v115 = vshrl.u32 1326507024, %v100
  %v116 = vor.u32 %v114, %v115
  %vm117 = vcmp.lt.s32.totalorder %v98, 1
  %vm118 = vcmp.lt.s32.totalorder %v98, 2
  %vm119 = vcmp.lt.s32.totalorder %v98, 3
  %vm120 = vcmp.lt.s32.totalorder %v98, 4
  %v121 = vsel %vm117, %v101, %v104
  %v122 = vsel %vm120, %v110, 2102212464
  %v123 = vsel %vm119, %v107, %v122
  %v124 = vsel %vm118, %v121, %v123
  %v125 = vsel %vm117, %v104, %v107
  %v126 = vsel %vm120, %v113, 920167782
  %v127 = vsel %vm119, %v110, %v126
  %v128 = vsel %vm118, %v125, %v127
  %v129 = vsel %vm117, %v107, %v110
  %v130 = vsel %vm120, %v116, 1326507024
  %v131 = vsel %vm119, %v113, %v130
  %v132 = vsel %vm118, %v129, %v131
  %v133 = vshll.u32 %v93, 8
  %v134 = vand.u32 %v133, 65535
  %v135 = vshrl.u32 %v133, 16
  %v136 = vand.u32 %v132, 65535
  %v137 = vshrl.u32 %v132, 16
  %v138 = vmul.u32 %v134, %v136
  %v139 = vmul.u32 %v134, %v137
  %v140 = vmul.u32 %v135, %v136
  %v141 = vmul.u32 %v135, %v137
  %v142 = vshll.u32 %v139, 16
  %v143 = vshrl.u32 %v139, 16
  %v144 = vshll.u32 %v140, 16
  %v145 = vshrl.u32 %v140, 16
  %vm146 = vc.u32 %v138, %v142
  %v147 = vsel %vm146, 1, 0
  %v148 = vadd.s32 %v138, %v142
  %v149 = vadd.s32 %v141, %v147
  %vm150 = vc.u32 %v148, %v144
  %v151 = vsel %vm150, 1, 0
  %v152 = vadd.s32 %v148, %v144
  %v153 = vadd.s32 %v149, %v151
  %v154 = vadd.s32 %v153, %v143
  %v155 = vadd.s32 %v154, %v145
  %v156 = vand.u32 %v133, 65535
  %v157 = vshrl.u32 %v133, 16
  %v158 = vand.u32 %v128, 65535
  %v159 = vshrl.u32 %v128, 16
  %v160 = vmul.u32 %v156, %v158
  %v161 = vmul.u32 %v156, %v159
  %v162 = vmul.u32 %v157, %v158
  %v163 = vmul.u32 %v157, %v159
  %v164 = vshll.u32 %v161, 16
  %v165 = vshrl.u32 %v161, 16
  %v166 = vshll.u32 %v162, 16
  %v167 = vshrl.u32 %v162, 16
  %vm168 = vc.u32 %v160, %v164
  %v169 = vsel %vm168, 1, 0
  %v170 = vadd.s32 %v160, %v164
  %v171 = vadd.s32 %v163, %v169
  %vm172 = vc.u32 %v170, %v166
  %v173 = vsel %vm172, 1, 0
  %v174 = vadd.s32 %v170, %v166
  %v175 = vadd.s32 %v171, %v173
  %v176 = vadd.s32 %v175, %v165
  %v177 = vadd.s32 %v176, %v167
  %v178 = vmul.u32 %v133, %v124
  %v179 = vadd.s32 %v155, %v174
  %vm180 = vc.u32 %v155, %v174
  %v181 = vadd.s32 %v177, 1
  %v182 = vsel %vm180, %v181, %v177
  %v183 = vadd.s32 %v178, %v182
  %v184 = vadd.s32 %v183, 536870912
  %v185 = vshrl.u32 %v184, 30
  %v186 = vshll.u32 %v185, 30
  %v187 = vsub.s32 %v183, %v186
  %vm188 = vcmp.lt.s32.totalorder %v187, 0
  %v189 = vsub.s32 0, %v187
  %v190 = vsel %vm188, %v189, %v187
  %v191 = vclz %v190
  %v192 = vsub.s32 %v191, 2
  %vm193 = vcmp.gt.s32.totalorder 0, %v192
  %v194 = vsel %vm193, 0, %v192
  %v195 = vsub.s32 32, %v194
  %v196 = vshll.u32 %v187, %v194
  %v197 = vshrl.u32 %v179, %v195
  %v198 = vor.u32 %v196, %v197
  %v199 = vsub.s32 4294967266, %v194
  %v200 = vadd.s32 %v199, 127
  %v201 = vshll.u32 %v200, 23
  %v202 = vor.u32 4788187, %v201
  %v203 = vand.u32 2147483647, %v202
  %v205 = vcvt.s32.f32 %v198
  %v206 = vmul.f32 %v205, %v203
  %v207 = vxor.u32 %v206, 2147483648
  %v208 = vsel %vm87, %v207, %v206
  %v209 = vsub.s32 4, %v185
  %v210 = vsel %vm87, %v209, %v185
  %v211 = vsel %vm86, %v57, %v208
  %v212 = vsel %vm86, 0, %v210
  %v213 = vmul.f32 %v211, %v211
  %v214 = vmul.f32 %v213, -0.001358992
  %v215 = vadd.f32 %v214, 0.041655596
  %v216 = vmul.f32 %v213, %v215
  %v217 = vadd.f32 %v216, -0.4999988
  %v218 = vmul.f32 %v213, %v217
  %v219 = vadd.f32 1.0, %v218
  %v220 = vmul.f32 %v211, %v211
  %v221 = vmul.f32 %v220, -0.00019511016
  %v222 = vadd.f32 %v221, 0.008332121
  %v223 = vmul.f32 %v220, %v222
  %v224 = vadd.f32 %v223, -0.16666654
  %v225 = vmul.f32 %v220, %v224
  %v226 = vadd.f32 %v225, 1.0
  %v227 = vmul.f32 %v226, %v211
  %vm228 = vweird.f32 %v57
  %v229 = vadd.s32 %v212, 3
  %v230 = vand.u32 %v229, 3
  %vm231 = vcmp.lt.s32.totalorder %v230, 2
  %vm232 = vcmp.eq.s32.totalorder %v230, 0
  %v233 = vxor.u32 %v227, 2147483648
  %v234 = vsel %vm232, %v219, %v233
  %vm235 = vcmp.eq.s32.totalorder %v230, 2
  %v236 = vxor.u32 %v219, 2147483648
  %v237 = vsel %vm235, %v236, %v227
  %v238 = vsel %vm231, %v234, %v237
  %v239 = vsel %vm228, nan, %v238
  %v240 = vand.u32 2147483647, %v58
  %vm241 = vcmp.le.f32.partialorder %v240, 0.7853982
  %vm242 = vcmp.lt.s32.totalorder %v58, 0
  %v243 = vand.u32 %v58, 2139095040
  %v244 = vshrl.u32 %v243, 23
  %v245 = vsub.s32 %v244, 127
  %v246 = vand.u32 2147483647, %v58
  %v247 = vand.u32 %v246, 8388607
  %v248 = vor.u32 %v247, 8388608
  %v249 = vsub.s32 0, %v248
  %v250 = vadd.s32 %v245, 1
  %vm251 = vcmp.gt.s32.totalorder %v250, 0
  %v252 = vsel %vm251, %v250, 0
  %v253 = vshrl.u32 %v252, 5
  %v254 = vand.u32 %v252, 31
  %v255 = vsub.s32 32, %v254
  %v256 = vshrl.u32 683565275, %v255
  %v257 = vshll.u32 683565275, %v254
  %v258 = vshrl.u32 2475754826, %v255
  %v259 = vor.u32 %v257, %v258
  %v260 = vshll.u32 2475754826, %v254
  %v261 = vshrl.u32 2131351028, %v255
  %v262 = vor.u32 %v260, %v261
  %v263 = vshll.u32 2131351028, %v254
  %v264 = vshrl.u32 2102212464, %v255
  %v265 = vor.u32 %v263, %v264
  %v266 = vshll.u32 2102212464, %v254
  %v267 = vshrl.u32 920167782, %v255
  %v268 = vor.u32 %v266, %v267
  %v269 = vshll.u32 920167782, %v254
  %v270 = vshrl.u32 1326507024, %v255
  %v271 = vor.u32 %v269, %v270
  %vm272 = vcmp.lt.s32.totalorder %v253, 1
  %vm273 = vcmp.lt.s32.totalorder %v253, 2
  %vm274 = vcmp.lt.s32.totalorder %v253, 3
  %vm275 = vcmp.lt.s32.totalorder %v253, 4
  %v276 = vsel %vm272, %v256, %v259
  %v277 = vsel %vm275, %v265, 2102212464
  %v278 = vsel %vm274, %v262, %v277
  %v279 = vsel %vm273, %v276, %v278
  %v280 = vsel %vm272, %v259, %v262
  %v281 = vsel %vm275, %v268, 920167782
  %v282 = vsel %vm274, %v265, %v281
  %v283 = vsel %vm273, %v280, %v282
  %v284 = vsel %vm272, %v262, %v265
  %v285 = vsel %vm275, %v271, 1326507024
  %v286 = vsel %vm274, %v268, %v285
  %v287 = vsel %vm273, %v284, %v286
  %v288 = vshll.u32 %v248, 8
  %v289 = vand.u32 %v288, 65535
  %v290 = vshrl.u32 %v288, 16
  %v291 = vand.u32 %v287, 65535
  %v292 = vshrl.u32 %v287, 16
  %v293 = vmul.u32 %v289, %v291
  %v294 = vmul.u32 %v289, %v292
  %v295 = vmul.u32 %v290, %v291
  %v296 = vmul.u32 %v290, %v292
  %v297 = vshll.u32 %v294, 16
  %v298 = vshrl.u32 %v294, 16
  %v299 = vshll.u32 %v295, 16
  %v300 = vshrl.u32 %v295, 16
  %vm301 = vc.u32 %v293, %v297
  %v302 = vsel %vm301, 1, 0
  %v303 = vadd.s32 %v293, %v297
  %v304 = vadd.s32 %v296, %v302
  %vm305 = vc.u32 %v303, %v299
  %v306 = vsel %vm305, 1, 0
  %v307 = vadd.s32 %v303, %v299
  %v308 = vadd.s32 %v304, %v306
  %v309 = vadd.s32 %v308, %v298
  %v310 = vadd.s32 %v309, %v300
  %v311 = vand.u32 %v288, 65535
  %v312 = vshrl.u32 %v288, 16
  %v313 = vand.u32 %v283, 65535
  %v314 = vshrl.u32 %v283, 16
  %v315 = vmul.u32 %v311, %v313
  %v316 = vmul.u32 %v311, %v314
  %v317 = vmul.u32 %v312, %v313
  %v318 = vmul.u32 %v312, %v314
  %v319 = vshll.u32 %v316, 16
  %v320 = vshrl.u32 %v316, 16
  %v321 = vshll.u32 %v317, 16
  %v322 = vshrl.u32 %v317, 16
  %vm323 = vc.u32 %v315, %v319
  %v324 = vsel %vm323, 1, 0
  %v325 = vadd.s32 %v315, %v319
  %v326 = vadd.s32 %v318, %v324
  %vm327 = vc.u32 %v325, %v321
  %v328 = vsel %vm327, 1, 0
  %v329 = vadd.s32 %v325, %v321
  %v330 = vadd.s32 %v326, %v328
  %v331 = vadd.s32 %v330, %v320
  %v332 = vadd.s32 %v331, %v322
  %v333 = vmul.u32 %v288, %v279
  %v334 = vadd.s32 %v310, %v329
  %vm335 = vc.u32 %v310, %v329
  %v336 = vadd.s32 %v332, 1
  %v337 = vsel %vm335, %v336, %v332
  %v338 = vadd.s32 %v333, %v337
  %v339 = vadd.s32 %v338, 536870912
  %v340 = vshrl.u32 %v339, 30
  %v341 = vshll.u32 %v340, 30
  %v342 = vsub.s32 %v338, %v341
  %vm343 = vcmp.lt.s32.totalorder %v342, 0
  %v344 = vsub.s32 0, %v342
  %v345 = vsel %vm343, %v344, %v342
  %v346 = vclz %v345
  %v347 = vsub.s32 %v346, 2
  %vm348 = vcmp.gt.s32.totalorder 0, %v347
  %v349 = vsel %vm348, 0, %v347
  %v350 = vsub.s32 32, %v349
  %v351 = vshll.u32 %v342, %v349
  %v352 = vshrl.u32 %v334, %v350
  %v353 = vor.u32 %v351, %v352
  %v354 = vsub.s32 4294967266, %v349
  %v355 = vadd.s32 %v354, 127
  %v356 = vshll.u32 %v355, 23
  %v357 = vor.u32 4788187, %v356
  %v358 = vand.u32 2147483647, %v357
  %v360 = vcvt.s32.f32 %v353
  %v361 = vmul.f32 %v360, %v358
  %v362 = vxor.u32 %v361, 2147483648
  %v363 = vsel %vm242, %v362, %v361
  %v364 = vsub.s32 4, %v340
  %v365 = vsel %vm242, %v364, %v340
  %v366 = vsel %vm241, %v58, %v363
  %v367 = vsel %vm241, 0, %v365
  %v368 = vmul.f32 %v366, %v366
  %v369 = vmul.f32 %v368, -0.001358992
  %v370 = vadd.f32 %v369, 0.041655596
  %v371 = vmul.f32 %v368, %v370
  %v372 = vadd.f32 %v371, -0.4999988
  %v373 = vmul.f32 %v368, %v372
  %v374 = vadd.f32 1.0, %v373
  %v375 = vmul.f32 %v366, %v366
  %v376 = vmul.f32 %v375, -0.00019511016
  %v377 = vadd.f32 %v376, 0.008332121
  %v378 = vmul.f32 %v375, %v377
  %v379 = vadd.f32 %v378, -0.16666654
  %v380 = vmul.f32 %v375, %v379
  %v381 = vadd.f32 %v380, 1.0
  %v382 = vmul.f32 %v381, %v366
  %vm383 = vweird.f32 %v58
  %v384 = vadd.s32 %v367, 3
  %v385 = vand.u32 %v384, 3
  %vm386 = vcmp.lt.s32.totalorder %v385, 2
  %vm387 = vcmp.eq.s32.totalorder %v385, 0
  %v388 = vxor.u32 %v382, 2147483648
  %v389 = vsel %vm387, %v374, %v388
  %vm390 = vcmp.eq.s32.totalorder %v385, 2
  %v391 = vxor.u32 %v374, 2147483648
  %v392 = vsel %vm390, %v391, %v382
  %v393 = vsel %vm386, %v389, %v392
  %v394 = vsel %vm383, nan, %v393
  %v395 = vand.u32 2147483647, %v59
  %vm396 = vcmp.le.f32.partialorder %v395, 0.7853982
  %vm397 = vcmp.lt.s32.totalorder %v59, 0
  %v398 = vand.u32 %v59, 2139095040
  %v399 = vshrl.u32 %v398, 23
  %v400 = vsub.s32 %v399, 127
  %v401 = vand.u32 2147483647, %v59
  %v402 = vand.u32 %v401, 8388607
  %v403 = vor.u32 %v402, 8388608
  %v404 = vsub.s32 0, %v403
  %v405 = vadd.s32 %v400, 1
  %vm406 = vcmp.gt.s32.totalorder %v405, 0
  %v407 = vsel %vm406, %v405, 0
  %v408 = vshrl.u32 %v407, 5
  %v409 = vand.u32 %v407, 31
  %v410 = vsub.s32 32, %v409
  %v411 = vshrl.u32 683565275, %v410
  %v412 = vshll.u32 683565275, %v409
  %v413 = vshrl.u32 2475754826, %v410
  %v414 = vor.u32 %v412, %v413
  %v415 = vshll.u32 2475754826, %v409
  %v416 = vshrl.u32 2131351028, %v410
  %v417 = vor.u32 %v415, %v416
  %v418 = vshll.u32 2131351028, %v409
  %v419 = vshrl.u32 2102212464, %v410
  %v420 = vor.u32 %v418, %v419
  %v421 = vshll.u32 2102212464, %v409
  %v422 = vshrl.u32 920167782, %v410
  %v423 = vor.u32 %v421, %v422
  %v424 = vshll.u32 920167782, %v409
  %v425 = vshrl.u32 1326507024, %v410
  %v426 = vor.u32 %v424, %v425
  %vm427 = vcmp.lt.s32.totalorder %v408, 1
  %vm428 = vcmp.lt.s32.totalorder %v408, 2
  %vm429 = vcmp.lt.s32.totalorder %v408, 3
  %vm430 = vcmp.lt.s32.totalorder %v408, 4
  %v431 = vsel %vm427, %v411, %v414
  %v432 = vsel %vm430, %v420, 2102212464
  %v433 = vsel %vm429, %v417, %v432
  %v434 = vsel %vm428, %v431, %v433
  %v435 = vsel %vm427, %v414, %v417
  %v436 = vsel %vm430, %v423, 920167782
  %v437 = vsel %vm429, %v420, %v436
  %v438 = vsel %vm428, %v435, %v437
  %v439 = vsel %vm427, %v417, %v420
  %v440 = vsel %vm430, %v426, 1326507024
  %v441 = vsel %vm429, %v423, %v440
  %v442 = vsel %vm428, %v439, %v441
  %v443 = vshll.u32 %v403, 8
  %v444 = vand.u32 %v443, 65535
  %v445 = vshrl.u32 %v443, 16
  %v446 = vand.u32 %v442, 65535
  %v447 = vshrl.u32 %v442, 16
  %v448 = vmul.u32 %v444, %v446
  %v449 = vmul.u32 %v444, %v447
  %v450 = vmul.u32 %v445, %v446
  %v451 = vmul.u32 %v445, %v447
  %v452 = vshll.u32 %v449, 16
  %v453 = vshrl.u32 %v449, 16
  %v454 = vshll.u32 %v450, 16
  %v455 = vshrl.u32 %v450, 16
  %vm456 = vc.u32 %v448, %v452
  %v457 = vsel %vm456, 1, 0
  %v458 = vadd.s32 %v448, %v452
  %v459 = vadd.s32 %v451, %v457
  %vm460 = vc.u32 %v458, %v454
  %v461 = vsel %vm460, 1, 0
  %v462 = vadd.s32 %v458, %v454
  %v463 = vadd.s32 %v459, %v461
  %v464 = vadd.s32 %v463, %v453
  %v465 = vadd.s32 %v464, %v455
  %v466 = vand.u32 %v443, 65535
  %v467 = vshrl.u32 %v443, 16
  %v468 = vand.u32 %v438, 65535
  %v469 = vshrl.u32 %v438, 16
  %v470 = vmul.u32 %v466, %v468
  %v471 = vmul.u32 %v466, %v469
  %v472 = vmul.u32 %v467, %v468
  %v473 = vmul.u32 %v467, %v469
  %v474 = vshll.u32 %v471, 16
  %v475 = vshrl.u32 %v471, 16
  %v476 = vshll.u32 %v472, 16
  %v477 = vshrl.u32 %v472, 16
  %vm478 = vc.u32 %v470, %v474
  %v479 = vsel %vm478, 1, 0
  %v480 = vadd.s32 %v470, %v474
  %v481 = vadd.s32 %v473, %v479
  %vm482 = vc.u32 %v480, %v476
  %v483 = vsel %vm482, 1, 0
  %v484 = vadd.s32 %v480, %v476
  %v485 = vadd.s32 %v481, %v483
  %v486 = vadd.s32 %v485, %v475
  %v487 = vadd.s32 %v486, %v477
  %v488 = vmul.u32 %v443, %v434
  %v489 = vadd.s32 %v465, %v484
  %vm490 = vc.u32 %v465, %v484
  %v491 = vadd.s32 %v487, 1
  %v492 = vsel %vm490, %v491, %v487
  %v493 = vadd.s32 %v488, %v492
  %v494 = vadd.s32 %v493, 536870912
  %v495 = vshrl.u32 %v494, 30
  %v496 = vshll.u32 %v495, 30
  %v497 = vsub.s32 %v493, %v496
  %vm498 = vcmp.lt.s32.totalorder %v497, 0
  %v499 = vsub.s32 0, %v497
  %v500 = vsel %vm498, %v499, %v497
  %v501 = vclz %v500
  %v502 = vsub.s32 %v501, 2
  %vm503 = vcmp.gt.s32.totalorder 0, %v502
  %v504 = vsel %vm503, 0, %v502
  %v505 = vsub.s32 32, %v504
  %v506 = vshll.u32 %v497, %v504
  %v507 = vshrl.u32 %v489, %v505
  %v508 = vor.u32 %v506, %v507
  %v509 = vsub.s32 4294967266, %v504
  %v510 = vadd.s32 %v509, 127
  %v511 = vshll.u32 %v510, 23
  %v512 = vor.u32 4788187, %v511
  %v513 = vand.u32 2147483647, %v512
  %v515 = vcvt.s32.f32 %v508
  %v516 = vmul.f32 %v515, %v513
  %v517 = vxor.u32 %v516, 2147483648
  %v518 = vsel %vm397, %v517, %v516
  %v519 = vsub.s32 4, %v495
  %v520 = vsel %vm397, %v519, %v495
  %v521 = vsel %vm396, %v59, %v518
  %v522 = vsel %vm396, 0, %v520
  %v523 = vmul.f32 %v521, %v521
  %v524 = vmul.f32 %v523, -0.001358992
  %v525 = vadd.f32 %v524, 0.041655596
  %v526 = vmul.f32 %v523, %v525
  %v527 = vadd.f32 %v526, -0.4999988
  %v528 = vmul.f32 %v523, %v527
  %v529 = vadd.f32 1.0, %v528
  %v530 = vmul.f32 %v521, %v521
  %v531 = vmul.f32 %v530, -0.00019511016
  %v532 = vadd.f32 %v531, 0.008332121
  %v533 = vmul.f32 %v530, %v532
  %v534 = vadd.f32 %v533, -0.16666654
  %v535 = vmul.f32 %v530, %v534
  %v536 = vadd.f32 %v535, 1.0
  %v537 = vmul.f32 %v536, %v521
  %vm538 = vweird.f32 %v59
  %v539 = vadd.s32 %v522, 3
  %v540 = vand.u32 %v539, 3
  %vm541 = vcmp.lt.s32.totalorder %v540, 2
  %vm542 = vcmp.eq.s32.totalorder %v540, 0
  %v543 = vxor.u32 %v537, 2147483648
  %v544 = vsel %vm542, %v529, %v543
  %vm545 = vcmp.eq.s32.totalorder %v540, 2
  %v546 = vxor.u32 %v529, 2147483648
  %v547 = vsel %vm545, %v546, %v537
  %v548 = vsel %vm541, %v544, %v547
  %v549 = vsel %vm538, nan, %v548
  %v550 = vand.u32 2147483647, %v60
  %vm551 = vcmp.le.f32.partialorder %v550, 0.7853982
  %vm552 = vcmp.lt.s32.totalorder %v60, 0
  %v553 = vand.u32 %v60, 2139095040
  %v554 = vshrl.u32 %v553, 23
  %v555 = vsub.s32 %v554, 127
  %v556 = vand.u32 2147483647, %v60
  %v557 = vand.u32 %v556, 8388607
  %v558 = vor.u32 %v557, 8388608
  %v559 = vsub.s32 0, %v558
  %v560 = vadd.s32 %v555, 1
  %vm561 = vcmp.gt.s32.totalorder %v560, 0
  %v562 = vsel %vm561, %v560, 0
  %v563 = vshrl.u32 %v562, 5
  %v564 = vand.u32 %v562, 31
  %v565 = vsub.s32 32, %v564
  %v566 = vshrl.u32 683565275, %v565
  %v567 = vshll.u32 683565275, %v564
  %v568 = vshrl.u32 2475754826, %v565
  %v569 = vor.u32 %v567, %v568
  %v570 = vshll.u32 2475754826, %v564
  %v571 = vshrl.u32 2131351028, %v565
  %v572 = vor.u32 %v570, %v571
  %v573 = vshll.u32 2131351028, %v564
  %v574 = vshrl.u32 2102212464, %v565
  %v575 = vor.u32 %v573, %v574
  %v576 = vshll.u32 2102212464, %v564
  %v577 = vshrl.u32 920167782, %v565
  %v578 = vor.u32 %v576, %v577
  %v579 = vshll.u32 920167782, %v564
  %v580 = vshrl.u32 1326507024, %v565
  %v581 = vor.u32 %v579, %v580
  %vm582 = vcmp.lt.s32.totalorder %v563, 1
  %vm583 = vcmp.lt.s32.totalorder %v563, 2
  %vm584 = vcmp.lt.s32.totalorder %v563, 3
  %vm585 = vcmp.lt.s32.totalorder %v563, 4
  %v586 = vsel %vm582, %v566, %v569
  %v587 = vsel %vm585, %v575, 2102212464
  %v588 = vsel %vm584, %v572, %v587
  %v589 = vsel %vm583, %v586, %v588
  %v590 = vsel %vm582, %v569, %v572
  %v591 = vsel %vm585, %v578, 920167782
  %v592 = vsel %vm584, %v575, %v591
  %v593 = vsel %vm583, %v590, %v592
  %v594 = vsel %vm582, %v572, %v575
  %v595 = vsel %vm585, %v581, 1326507024
  %v596 = vsel %vm584, %v578, %v595
  %v597 = vsel %vm583, %v594, %v596
  %v598 = vshll.u32 %v558, 8
  %v599 = vand.u32 %v598, 65535
  %v600 = vshrl.u32 %v598, 16
  %v601 = vand.u32 %v597, 65535
  %v602 = vshrl.u32 %v597, 16
  %v603 = vmul.u32 %v599, %v601
  %v604 = vmul.u32 %v599, %v602
  %v605 = vmul.u32 %v600, %v601
  %v606 = vmul.u32 %v600, %v602
  %v607 = vshll.u32 %v604, 16
  %v608 = vshrl.u32 %v604, 16
  %v609 = vshll.u32 %v605, 16
  %v610 = vshrl.u32 %v605, 16
  %vm611 = vc.u32 %v603, %v607
  %v612 = vsel %vm611, 1, 0
  %v613 = vadd.s32 %v603, %v607
  %v614 = vadd.s32 %v606, %v612
  %vm615 = vc.u32 %v613, %v609
  %v616 = vsel %vm615, 1, 0
  %v617 = vadd.s32 %v613, %v609
  %v618 = vadd.s32 %v614, %v616
  %v619 = vadd.s32 %v618, %v608
  %v620 = vadd.s32 %v619, %v610
  %v621 = vand.u32 %v598, 65535
  %v622 = vshrl.u32 %v598, 16
  %v623 = vand.u32 %v593, 65535
  %v624 = vshrl.u32 %v593, 16
  %v625 = vmul.u32 %v621, %v623
  %v626 = vmul.u32 %v621, %v624
  %v627 = vmul.u32 %v622, %v623
  %v628 = vmul.u32 %v622, %v624
  %v629 = vshll.u32 %v626, 16
  %v630 = vshrl.u32 %v626, 16
  %v631 = vshll.u32 %v627, 16
  %v632 = vshrl.u32 %v627, 16
  %vm633 = vc.u32 %v625, %v629
  %v634 = vsel %vm633, 1, 0
  %v635 = vadd.s32 %v625, %v629
  %v636 = vadd.s32 %v628, %v634
  %vm637 = vc.u32 %v635, %v631
  %v638 = vsel %vm637, 1, 0
  %v639 = vadd.s32 %v635, %v631
  %v640 = vadd.s32 %v636, %v638
  %v641 = vadd.s32 %v640, %v630
  %v642 = vadd.s32 %v641, %v632
  %v643 = vmul.u32 %v598, %v589
  %v644 = vadd.s32 %v620, %v639
  %vm645 = vc.u32 %v620, %v639
  %v646 = vadd.s32 %v642, 1
  %v647 = vsel %vm645, %v646, %v642
  %v648 = vadd.s32 %v643, %v647
  %v649 = vadd.s32 %v648, 536870912
  %v650 = vshrl.u32 %v649, 30
  %v651 = vshll.u32 %v650, 30
  %v652 = vsub.s32 %v648, %v651
  %vm653 = vcmp.lt.s32.totalorder %v652, 0
  %v654 = vsub.s32 0, %v652
  %v655 = vsel %vm653, %v654, %v652
  %v656 = vclz %v655
  %v657 = vsub.s32 %v656, 2
  %vm658 = vcmp.gt.s32.totalorder 0, %v657
  %v659 = vsel %vm658, 0, %v657
  %v660 = vsub.s32 32, %v659
  %v661 = vshll.u32 %v652, %v659
  %v662 = vshrl.u32 %v644, %v660
  %v663 = vor.u32 %v661, %v662
  %v664 = vsub.s32 4294967266, %v659
  %v665 = vadd.s32 %v664, 127
  %v666 = vshll.u32 %v665, 23
  %v667 = vor.u32 4788187, %v666
  %v668 = vand.u32 2147483647, %v667
  %v670 = vcvt.s32.f32 %v663
  %v671 = vmul.f32 %v670, %v668
  %v672 = vxor.u32 %v671, 2147483648
  %v673 = vsel %vm552, %v672, %v671
  %v674 = vsub.s32 4, %v650
  %v675 = vsel %vm552, %v674, %v650
  %v676 = vsel %vm551, %v60, %v673
  %v677 = vsel %vm551, 0, %v675
  %v678 = vmul.f32 %v676, %v676
  %v679 = vmul.f32 %v678, -0.001358992
  %v680 = vadd.f32 %v679, 0.041655596
  %v681 = vmul.f32 %v678, %v680
  %v682 = vadd.f32 %v681, -0.4999988
  %v683 = vmul.f32 %v678, %v682
  %v684 = vadd.f32 1.0, %v683
  %v685 = vmul.f32 %v676, %v676
  %v686 = vmul.f32 %v685, -0.00019511016
  %v687 = vadd.f32 %v686, 0.008332121
  %v688 = vmul.f32 %v685, %v687
  %v689 = vadd.f32 %v688, -0.16666654
  %v690 = vmul.f32 %v685, %v689
  %v691 = vadd.f32 %v690, 1.0
  %v692 = vmul.f32 %v691, %v676
  %vm693 = vweird.f32 %v60
  %v694 = vadd.s32 %v677, 3
  %v695 = vand.u32 %v694, 3
  %vm696 = vcmp.lt.s32.totalorder %v695, 2
  %vm697 = vcmp.eq.s32.totalorder %v695, 0
  %v698 = vxor.u32 %v692, 2147483648
  %v699 = vsel %vm697, %v684, %v698
  %vm700 = vcmp.eq.s32.totalorder %v695, 2
  %v701 = vxor.u32 %v684, 2147483648
  %v702 = vsel %vm700, %v701, %v692
  %v703 = vsel %vm696, %v699, %v702
  %v704 = vsel %vm693, nan, %v703
  %v705 = vand.u32 2147483647, %v81
  %vm706 = vcmp.le.f32.partialorder %v705, 0.7853982
  %vm707 = vcmp.lt.s32.totalorder %v81, 0
  %v708 = vand.u32 %v81, 2139095040
  %v709 = vshrl.u32 %v708, 23
  %v710 = vsub.s32 %v709, 127
  %v711 = vand.u32 2147483647, %v81
  %v712 = vand.u32 %v711, 8388607
  %v713 = vor.u32 %v712, 8388608
  %v714 = vsub.s32 0, %v713
  %v715 = vadd.s32 %v710, 1
  %vm716 = vcmp.gt.s32.totalorder %v715, 0
  %v717 = vsel %vm716, %v715, 0
  %v718 = vshrl.u32 %v717, 5
  %v719 = vand.u32 %v717, 31
  %v720 = vsub.s32 32, %v719
  %v721 = vshrl.u32 683565275, %v720
  %v722 = vshll.u32 683565275, %v719
  %v723 = vshrl.u32 2475754826, %v720
  %v724 = vor.u32 %v722, %v723
  %v725 = vshll.u32 2475754826, %v719
  %v726 = vshrl.u32 2131351028, %v720
  %v727 = vor.u32 %v725, %v726
  %v728 = vshll.u32 2131351028, %v719
  %v729 = vshrl.u32 2102212464, %v720
  %v730 = vor.u32 %v728, %v729
  %v731 = vshll.u32 2102212464, %v719
  %v732 = vshrl.u32 920167782, %v720
  %v733 = vor.u32 %v731, %v732
  %v734 = vshll.u32 920167782, %v719
  %v735 = vshrl.u32 1326507024, %v720
  %v736 = vor.u32 %v734, %v735
  %vm737 = vcmp.lt.s32.totalorder %v718, 1
  %vm738 = vcmp.lt.s32.totalorder %v718, 2
  %vm739 = vcmp.lt.s32.totalorder %v718, 3
  %vm740 = vcmp.lt.s32.totalorder %v718, 4
  %v741 = vsel %vm737, %v721, %v724
  %v742 = vsel %vm740, %v730, 2102212464
  %v743 = vsel %vm739, %v727, %v742
  %v744 = vsel %vm738, %v741, %v743
  %v745 = vsel %vm737, %v724, %v727
  %v746 = vsel %vm740, %v733, 920167782
  %v747 = vsel %vm739, %v730, %v746
  %v748 = vsel %vm738, %v745, %v747
  %v749 = vsel %vm737, %v727, %v730
  %v750 = vsel %vm740, %v736, 1326507024
  %v751 = vsel %vm739, %v733, %v750
  %v752 = vsel %vm738, %v749, %v751
  %v753 = vshll.u32 %v713, 8
  %v754 = vand.u32 %v753, 65535
  %v755 = vshrl.u32 %v753, 16
  %v756 = vand.u32 %v752, 65535
  %v757 = vshrl.u32 %v752, 16
  %v758 = vmul.u32 %v754, %v756
  %v759 = vmul.u32 %v754, %v757
  %v760 = vmul.u32 %v755, %v756
  %v761 = vmul.u32 %v755, %v757
  %v762 = vshll.u32 %v759, 16
  %v763 = vshrl.u32 %v759, 16
  %v764 = vshll.u32 %v760, 16
  %v765 = vshrl.u32 %v760, 16
  %vm766 = vc.u32 %v758, %v762
  %v767 = vsel %vm766, 1, 0
  %v768 = vadd.s32 %v758, %v762
  %v769 = vadd.s32 %v761, %v767
  %vm770 = vc.u32 %v768, %v764
  %v771 = vsel %vm770, 1, 0
  %v772 = vadd.s32 %v768, %v764
  %v773 = vadd.s32 %v769, %v771
  %v774 = vadd.s32 %v773, %v763
  %v775 = vadd.s32 %v774, %v765
  %v776 = vand.u32 %v753, 65535
  %v777 = vshrl.u32 %v753, 16
  %v778 = vand.u32 %v748, 65535
  %v779 = vshrl.u32 %v748, 16
  %v780 = vmul.u32 %v776, %v778
  %v781 = vmul.u32 %v776, %v779
  %v782 = vmul.u32 %v777, %v778
  %v783 = vmul.u32 %v777, %v779
  %v784 = vshll.u32 %v781, 16
  %v785 = vshrl.u32 %v781, 16
  %v786 = vshll.u32 %v782, 16
  %v787 = vshrl.u32 %v782, 16
  %vm788 = vc.u32 %v780, %v784
  %v789 = vsel %vm788, 1, 0
  %v790 = vadd.s32 %v780, %v784
  %v791 = vadd.s32 %v783, %v789
  %vm792 = vc.u32 %v790, %v786
  %v793 = vsel %vm792, 1, 0
  %v794 = vadd.s32 %v790, %v786
  %v795 = vadd.s32 %v791, %v793
  %v796 = vadd.s32 %v795, %v785
  %v797 = vadd.s32 %v796, %v787
  %v798 = vmul.u32 %v753, %v744
  %v799 = vadd.s32 %v775, %v794
  %vm800 = vc.u32 %v775, %v794
  %v801 = vadd.s32 %v797, 1
  %v802 = vsel %vm800, %v801, %v797
  %v803 = vadd.s32 %v798, %v802
  %v804 = vadd.s32 %v803, 536870912
  %v805 = vshrl.u32 %v804, 30
  %v806 = vshll.u32 %v805, 30
  %v807 = vsub.s32 %v803, %v806
  %vm808 = vcmp.lt.s32.totalorder %v807, 0
  %v809 = vsub.s32 0, %v807
  %v810 = vsel %vm808, %v809, %v807
  %v811 = vclz %v810
  %v812 = vsub.s32 %v811, 2
  %vm813 = vcmp.gt.s32.totalorder 0, %v812
  %v814 = vsel %vm813, 0, %v812
  %v815 = vsub.s32 32, %v814
  %v816 = vshll.u32 %v807, %v814
  %v817 = vshrl.u32 %v799, %v815
  %v818 = vor.u32 %v816, %v817
  %v819 = vsub.s32 4294967266, %v814
  %v820 = vadd.s32 %v819, 127
  %v821 = vshll.u32 %v820, 23
  %v822 = vor.u32 4788187, %v821
  %v823 = vand.u32 2147483647, %v822
  %v825 = vcvt.s32.f32 %v818
  %v826 = vmul.f32 %v825, %v823
  %v827 = vxor.u32 %v826, 2147483648
  %v828 = vsel %vm707, %v827, %v826
  %v829 = vsub.s32 4, %v805
  %v830 = vsel %vm707, %v829, %v805
  %v831 = vsel %vm706, %v81, %v828
  %v832 = vsel %vm706, 0, %v830
  %v833 = vmul.f32 %v831, %v831
  %v834 = vmul.f32 %v833, -0.001358992
  %v835 = vadd.f32 %v834, 0.041655596
  %v836 = vmul.f32 %v833, %v835
  %v837 = vadd.f32 %v836, -0.4999988
  %v838 = vmul.f32 %v833, %v837
  %v839 = vadd.f32 1.0, %v838
  %v840 = vmul.f32 %v831, %v831
  %v841 = vmul.f32 %v840, -0.00019511016
  %v842 = vadd.f32 %v841, 0.008332121
  %v843 = vmul.f32 %v840, %v842
  %v844 = vadd.f32 %v843, -0.16666654
  %v845 = vmul.f32 %v840, %v844
  %v846 = vadd.f32 %v845, 1.0
  %v847 = vmul.f32 %v846, %v831
  %vm848 = vweird.f32 %v81
  %v849 = vand.u32 %v832, 3
  %vm850 = vcmp.lt.s32.totalorder %v849, 2
  %vm851 = vcmp.eq.s32.totalorder %v849, 0
  %v852 = vxor.u32 %v847, 2147483648
  %v853 = vsel %vm851, %v839, %v852
  %vm854 = vcmp.eq.s32.totalorder %v849, 2
  %v855 = vxor.u32 %v839, 2147483648
  %v856 = vsel %vm854, %v855, %v847
  %v857 = vsel %vm850, %v853, %v856
  %v858 = vsel %vm848, nan, %v857
  %v859 = vand.u32 2147483647, %v82
  %vm860 = vcmp.le.f32.partialorder %v859, 0.7853982
  %vm861 = vcmp.lt.s32.totalorder %v82, 0
  %v862 = vand.u32 %v82, 2139095040
  %v863 = vshrl.u32 %v862, 23
  %v864 = vsub.s32 %v863, 127
  %v865 = vand.u32 2147483647, %v82
  %v866 = vand.u32 %v865, 8388607
  %v867 = vor.u32 %v866, 8388608
  %v868 = vsub.s32 0, %v867
  %v869 = vadd.s32 %v864, 1
  %vm870 = vcmp.gt.s32.totalorder %v869, 0
  %v871 = vsel %vm870, %v869, 0
  %v872 = vshrl.u32 %v871, 5
  %v873 = vand.u32 %v871, 31
  %v874 = vsub.s32 32, %v873
  %v875 = vshrl.u32 683565275, %v874
  %v876 = vshll.u32 683565275, %v873
  %v877 = vshrl.u32 2475754826, %v874
  %v878 = vor.u32 %v876, %v877
  %v879 = vshll.u32 2475754826, %v873
  %v880 = vshrl.u32 2131351028, %v874
  %v881 = vor.u32 %v879, %v880
  %v882 = vshll.u32 2131351028, %v873
  %v883 = vshrl.u32 2102212464, %v874
  %v884 = vor.u32 %v882, %v883
  %v885 = vshll.u32 2102212464, %v873
  %v886 = vshrl.u32 920167782, %v874
  %v887 = vor.u32 %v885, %v886
  %v888 = vshll.u32 920167782, %v873
  %v889 = vshrl.u32 1326507024, %v874
  %v890 = vor.u32 %v888, %v889
  %vm891 = vcmp.lt.s32.totalorder %v872, 1
  %vm892 = vcmp.lt.s32.totalorder %v872, 2
  %vm893 = vcmp.lt.s32.totalorder %v872, 3
  %vm894 = vcmp.lt.s32.totalorder %v872, 4
  %v895 = vsel %vm891, %v875, %v878
  %v896 = vsel %vm894, %v884, 2102212464
  %v897 = vsel %vm893, %v881, %v896
  %v898 = vsel %vm892, %v895, %v897
  %v899 = vsel %vm891, %v878, %v881
  %v900 = vsel %vm894, %v887, 920167782
  %v901 = vsel %vm893, %v884, %v900
  %v902 = vsel %vm892, %v899, %v901
  %v903 = vsel %vm891, %v881, %v884
  %v904 = vsel %vm894, %v890, 1326507024
  %v905 = vsel %vm893, %v887, %v904
  %v906 = vsel %vm892, %v903, %v905
  %v907 = vshll.u32 %v867, 8
  %v908 = vand.u32 %v907, 65535
  %v909 = vshrl.u32 %v907, 16
  %v910 = vand.u32 %v906, 65535
  %v911 = vshrl.u32 %v906, 16
  %v912 = vmul.u32 %v908, %v910
  %v913 = vmul.u32 %v908, %v911
  %v914 = vmul.u32 %v909, %v910
  %v915 = vmul.u32 %v909, %v911
  %v916 = vshll.u32 %v913, 16
  %v917 = vshrl.u32 %v913, 16
  %v918 = vshll.u32 %v914, 16
  %v919 = vshrl.u32 %v914, 16
  %vm920 = vc.u32 %v912, %v916
  %v921 = vsel %vm920, 1, 0
  %v922 = vadd.s32 %v912, %v916
  %v923 = vadd.s32 %v915, %v921
  %vm924 = vc.u32 %v922, %v918
  %v925 = vsel %vm924, 1, 0
  %v926 = vadd.s32 %v922, %v918
  %v927 = vadd.s32 %v923, %v925
  %v928 = vadd.s32 %v927, %v917
  %v929 = vadd.s32 %v928, %v919
  %v930 = vand.u32 %v907, 65535
  %v931 = vshrl.u32 %v907, 16
  %v932 = vand.u32 %v902, 65535
  %v933 = vshrl.u32 %v902, 16
  %v934 = vmul.u32 %v930, %v932
  %v935 = vmul.u32 %v930, %v933
  %v936 = vmul.u32 %v931, %v932
  %v937 = vmul.u32 %v931, %v933
  %v938 = vshll.u32 %v935, 16
  %v939 = vshrl.u32 %v935, 16
  %v940 = vshll.u32 %v936, 16
  %v941 = vshrl.u32 %v936, 16
  %vm942 = vc.u32 %v934, %v938
  %v943 = vsel %vm942, 1, 0
  %v944 = vadd.s32 %v934, %v938
  %v945 = vadd.s32 %v937, %v943
  %vm946 = vc.u32 %v944, %v940
  %v947 = vsel %vm946, 1, 0
  %v948 = vadd.s32 %v944, %v940
  %v949 = vadd.s32 %v945, %v947
  %v950 = vadd.s32 %v949, %v939
  %v951 = vadd.s32 %v950, %v941
  %v952 = vmul.u32 %v907, %v898
  %v953 = vadd.s32 %v929, %v948
  %vm954 = vc.u32 %v929, %v948
  %v955 = vadd.s32 %v951, 1
  %v956 = vsel %vm954, %v955, %v951
  %v957 = vadd.s32 %v952, %v956
  %v958 = vadd.s32 %v957, 536870912
  %v959 = vshrl.u32 %v958, 30
  %v960 = vshll.u32 %v959, 30
  %v961 = vsub.s32 %v957, %v960
  %vm962 = vcmp.lt.s32.totalorder %v961, 0
  %v963 = vsub.s32 0, %v961
  %v964 = vsel %vm962, %v963, %v961
  %v965 = vclz %v964
  %v966 = vsub.s32 %v965, 2
  %vm967 = vcmp.gt.s32.totalorder 0, %v966
  %v968 = vsel %vm967, 0, %v966
  %v969 = vsub.s32 32, %v968
  %v970 = vshll.u32 %v961, %v968
  %v971 = vshrl.u32 %v953, %v969
  %v972 = vor.u32 %v970, %v971
  %v973 = vsub.s32 4294967266, %v968
  %v974 = vadd.s32 %v973, 127
  %v975 = vshll.u32 %v974, 23
  %v976 = vor.u32 4788187, %v975
  %v977 = vand.u32 2147483647, %v976
  %v979 = vcvt.s32.f32 %v972
  %v980 = vmul.f32 %v979, %v977
  %v981 = vxor.u32 %v980, 2147483648
  %v982 = vsel %vm861, %v981, %v980
  %v983 = vsub.s32 4, %v959
  %v984 = vsel %vm861, %v983, %v959
  %v985 = vsel %vm860, %v82, %v982
  %v986 = vsel %vm860, 0, %v984
  %v987 = vmul.f32 %v985, %v985
  %v988 = vmul.f32 %v987, -0.001358992
  %v989 = vadd.f32 %v988, 0.041655596
  %v990 = vmul.f32 %v987, %v989
  %v991 = vadd.f32 %v990, -0.4999988
  %v992 = vmul.f32 %v987, %v991
  %v993 = vadd.f32 1.0, %v992
  %v994 = vmul.f32 %v985, %v985
  %v995 = vmul.f32 %v994, -0.00019511016
  %v996 = vadd.f32 %v995, 0.008332121
  %v997 = vmul.f32 %v994, %v996
  %v998 = vadd.f32 %v997, -0.16666654
  %v999 = vmul.f32 %v994, %v998
  %v1000 = vadd.f32 %v999, 1.0
  %v1001 = vmul.f32 %v1000, %v985
  %vm1002 = vweird.f32 %v82
  %v1003 = vand.u32 %v986, 3
  %vm1004 = vcmp.lt.s32.totalorder %v1003, 2
  %vm1005 = vcmp.eq.s32.totalorder %v1003, 0
  %v1006 = vxor.u32 %v1001, 2147483648
  %v1007 = vsel %vm1005, %v993, %v1006
  %vm1008 = vcmp.eq.s32.totalorder %v1003, 2
  %v1009 = vxor.u32 %v993, 2147483648
  %v1010 = vsel %vm1008, %v1009, %v1001
  %v1011 = vsel %vm1004, %v1007, %v1010
  %v1012 = vsel %vm1002, nan, %v1011
  %v1013 = vand.u32 2147483647, %v83
  %vm1014 = vcmp.le.f32.partialorder %v1013, 0.7853982
  %vm1015 = vcmp.lt.s32.totalorder %v83, 0
  %v1016 = vand.u32 %v83, 2139095040
  %v1017 = vshrl.u32 %v1016, 23
  %v1018 = vsub.s32 %v1017, 127
  %v1019 = vand.u32 2147483647, %v83
  %v1020 = vand.u32 %v1019, 8388607
  %v1021 = vor.u32 %v1020, 8388608
  %v1022 = vsub.s32 0, %v1021
  %v1023 = vadd.s32 %v1018, 1
  %vm1024 = vcmp.gt.s32.totalorder %v1023, 0
  %v1025 = vsel %vm1024, %v1023, 0
  %v1026 = vshrl.u32 %v1025, 5
  %v1027 = vand.u32 %v1025, 31
  %v1028 = vsub.s32 32, %v1027
  %v1029 = vshrl.u32 683565275, %v1028
  %v1030 = vshll.u32 683565275, %v1027
  %v1031 = vshrl.u32 2475754826, %v1028
  %v1032 = vor.u32 %v1030, %v1031
  %v1033 = vshll.u32 2475754826, %v1027
  %v1034 = vshrl.u32 2131351028, %v1028
  %v1035 = vor.u32 %v1033, %v1034
  %v1036 = vshll.u32 2131351028, %v1027
  %v1037 = vshrl.u32 2102212464, %v1028
  %v1038 = vor.u32 %v1036, %v1037
  %v1039 = vshll.u32 2102212464, %v1027
  %v1040 = vshrl.u32 920167782, %v1028
  %v1041 = vor.u32 %v1039, %v1040
  %v1042 = vshll.u32 920167782, %v1027
  %v1043 = vshrl.u32 1326507024, %v1028
  %v1044 = vor.u32 %v1042, %v1043
  %vm1045 = vcmp.lt.s32.totalorder %v1026, 1
  %vm1046 = vcmp.lt.s32.totalorder %v1026, 2
  %vm1047 = vcmp.lt.s32.totalorder %v1026, 3
  %vm1048 = vcmp.lt.s32.totalorder %v1026, 4
  %v1049 = vsel %vm1045, %v1029, %v1032
  %v1050 = vsel %vm1048, %v1038, 2102212464
  %v1051 = vsel %vm1047, %v1035, %v1050
  %v1052 = vsel %vm1046, %v1049, %v1051
  %v1053 = vsel %vm1045, %v1032, %v1035
  %v1054 = vsel %vm1048, %v1041, 920167782
  %v1055 = vsel %vm1047, %v1038, %v1054
  %v1056 = vsel %vm1046, %v1053, %v1055
  %v1057 = vsel %vm1045, %v1035, %v1038
  %v1058 = vsel %vm1048, %v1044, 1326507024
  %v1059 = vsel %vm1047, %v1041, %v1058
  %v1060 = vsel %vm1046, %v1057, %v1059
  %v1061 = vshll.u32 %v1021, 8
  %v1062 = vand.u32 %v1061, 65535
  %v1063 = vshrl.u32 %v1061, 16
  %v1064 = vand.u32 %v1060, 65535
  %v1065 = vshrl.u32 %v1060, 16
  %v1066 = vmul.u32 %v1062, %v1064
  %v1067 = vmul.u32 %v1062, %v1065
  %v1068 = vmul.u32 %v1063, %v1064
  %v1069 = vmul.u32 %v1063, %v1065
  %v1070 = vshll.u32 %v1067, 16
  %v1071 = vshrl.u32 %v1067, 16
  %v1072 = vshll.u32 %v1068, 16
  %v1073 = vshrl.u32 %v1068, 16
  %vm1074 = vc.u32 %v1066, %v1070
  %v1075 = vsel %vm1074, 1, 0
  %v1076 = vadd.s32 %v1066, %v1070
  %v1077 = vadd.s32 %v1069, %v1075
  %vm1078 = vc.u32 %v1076, %v1072
  %v1079 = vsel %vm1078, 1, 0
  %v1080 = vadd.s32 %v1076, %v1072
  %v1081 = vadd.s32 %v1077, %v1079
  %v1082 = vadd.s32 %v1081, %v1071
  %v1083 = vadd.s32 %v1082, %v1073
  %v1084 = vand.u32 %v1061, 65535
  %v1085 = vshrl.u32 %v1061, 16
  %v1086 = vand.u32 %v1056, 65535
  %v1087 = vshrl.u32 %v1056, 16
  %v1088 = vmul.u32 %v1084, %v1086
  %v1089 = vmul.u32 %v1084, %v1087
  %v1090 = vmul.u32 %v1085, %v1086
  %v1091 = vmul.u32 %v1085, %v1087
  %v1092 = vshll.u32 %v1089, 16
  %v1093 = vshrl.u32 %v1089, 16
  %v1094 = vshll.u32 %v1090, 16
  %v1095 = vshrl.u32 %v1090, 16
  %vm1096 = vc.u32 %v1088, %v1092
  %v1097 = vsel %vm1096, 1, 0
  %v1098 = vadd.s32 %v1088, %v1092
  %v1099 = vadd.s32 %v1091, %v1097
  %vm1100 = vc.u32 %v1098, %v1094
  %v1101 = vsel %vm1100, 1, 0
  %v1102 = vadd.s32 %v1098, %v1094
  %v1103 = vadd.s32 %v1099, %v1101
  %v1104 = vadd.s32 %v1103, %v1093
  %v1105 = vadd.s32 %v1104, %v1095
  %v1106 = vmul.u32 %v1061, %v1052
  %v1107 = vadd.s32 %v1083, %v1102
  %vm1108 = vc.u32 %v1083, %v1102
  %v1109 = vadd.s32 %v1105, 1
  %v1110 = vsel %vm1108, %v1109, %v1105
  %v1111 = vadd.s32 %v1106, %v1110
  %v1112 = vadd.s32 %v1111, 536870912
  %v1113 = vshrl.u32 %v1112, 30
  %v1114 = vshll.u32 %v1113, 30
  %v1115 = vsub.s32 %v1111, %v1114
  %vm1116 = vcmp.lt.s32.totalorder %v1115, 0
  %v1117 = vsub.s32 0, %v1115
  %v1118 = vsel %vm1116, %v1117, %v1115
  %v1119 = vclz %v1118
  %v1120 = vsub.s32 %v1119, 2
  %vm1121 = vcmp.gt.s32.totalorder 0, %v1120
  %v1122 = vsel %vm1121, 0, %v1120
  %v1123 = vsub.s32 32, %v1122
  %v1124 = vshll.u32 %v1115, %v1122
  %v1125 = vshrl.u32 %v1107, %v1123
  %v1126 = vor.u32 %v1124, %v1125
  %v1127 = vsub.s32 4294967266, %v1122
  %v1128 = vadd.s32 %v1127, 127
  %v1129 = vshll.u32 %v1128, 23
  %v1130 = vor.u32 4788187, %v1129
  %v1131 = vand.u32 2147483647, %v1130
  %v1133 = vcvt.s32.f32 %v1126
  %v1134 = vmul.f32 %v1133, %v1131
  %v1135 = vxor.u32 %v1134, 2147483648
  %v1136 = vsel %vm1015, %v1135, %v1134
  %v1137 = vsub.s32 4, %v1113
  %v1138 = vsel %vm1015, %v1137, %v1113
  %v1139 = vsel %vm1014, %v83, %v1136
  %v1140 = vsel %vm1014, 0, %v1138
  %v1141 = vmul.f32 %v1139, %v1139
  %v1142 = vmul.f32 %v1141, -0.001358992
  %v1143 = vadd.f32 %v1142, 0.041655596
  %v1144 = vmul.f32 %v1141, %v1143
  %v1145 = vadd.f32 %v1144, -0.4999988
  %v1146 = vmul.f32 %v1141, %v1145
  %v1147 = vadd.f32 1.0, %v1146
  %v1148 = vmul.f32 %v1139, %v1139
  %v1149 = vmul.f32 %v1148, -0.00019511016
  %v1150 = vadd.f32 %v1149, 0.008332121
  %v1151 = vmul.f32 %v1148, %v1150
  %v1152 = vadd.f32 %v1151, -0.16666654
  %v1153 = vmul.f32 %v1148, %v1152
  %v1154 = vadd.f32 %v1153, 1.0
  %v1155 = vmul.f32 %v1154, %v1139
  %vm1156 = vweird.f32 %v83
  %v1157 = vand.u32 %v1140, 3
  %vm1158 = vcmp.lt.s32.totalorder %v1157, 2
  %vm1159 = vcmp.eq.s32.totalorder %v1157, 0
  %v1160 = vxor.u32 %v1155, 2147483648
  %v1161 = vsel %vm1159, %v1147, %v1160
  %vm1162 = vcmp.eq.s32.totalorder %v1157, 2
  %v1163 = vxor.u32 %v1147, 2147483648
  %v1164 = vsel %vm1162, %v1163, %v1155
  %v1165 = vsel %vm1158, %v1161, %v1164
  %v1166 = vsel %vm1156, nan, %v1165
  %v1167 = vand.u32 2147483647, %v84
  %vm1168 = vcmp.le.f32.partialorder %v1167, 0.7853982
  %vm1169 = vcmp.lt.s32.totalorder %v84, 0
  %v1170 = vand.u32 %v84, 2139095040
  %v1171 = vshrl.u32 %v1170, 23
  %v1172 = vsub.s32 %v1171, 127
  %v1173 = vand.u32 2147483647, %v84
  %v1174 = vand.u32 %v1173, 8388607
  %v1175 = vor.u32 %v1174, 8388608
  %v1176 = vsub.s32 0, %v1175
  %v1177 = vadd.s32 %v1172, 1
  %vm1178 = vcmp.gt.s32.totalorder %v1177, 0
  %v1179 = vsel %vm1178, %v1177, 0
  %v1180 = vshrl.u32 %v1179, 5
  %v1181 = vand.u32 %v1179, 31
  %v1182 = vsub.s32 32, %v1181
  %v1183 = vshrl.u32 683565275, %v1182
  %v1184 = vshll.u32 683565275, %v1181
  %v1185 = vshrl.u32 2475754826, %v1182
  %v1186 = vor.u32 %v1184, %v1185
  %v1187 = vshll.u32 2475754826, %v1181
  %v1188 = vshrl.u32 2131351028, %v1182
  %v1189 = vor.u32 %v1187, %v1188
  %v1190 = vshll.u32 2131351028, %v1181
  %v1191 = vshrl.u32 2102212464, %v1182
  %v1192 = vor.u32 %v1190, %v1191
  %v1193 = vshll.u32 2102212464, %v1181
  %v1194 = vshrl.u32 920167782, %v1182
  %v1195 = vor.u32 %v1193, %v1194
  %v1196 = vshll.u32 920167782, %v1181
  %v1197 = vshrl.u32 1326507024, %v1182
  %v1198 = vor.u32 %v1196, %v1197
  %vm1199 = vcmp.lt.s32.totalorder %v1180, 1
  %vm1200 = vcmp.lt.s32.totalorder %v1180, 2
  %vm1201 = vcmp.lt.s32.totalorder %v1180, 3
  %vm1202 = vcmp.lt.s32.totalorder %v1180, 4
  %v1203 = vsel %vm1199, %v1183, %v1186
  %v1204 = vsel %vm1202, %v1192, 2102212464
  %v1205 = vsel %vm1201, %v1189, %v1204
  %v1206 = vsel %vm1200, %v1203, %v1205
  %v1207 = vsel %vm1199, %v1186, %v1189
  %v1208 = vsel %vm1202, %v1195, 920167782
  %v1209 = vsel %vm1201, %v1192, %v1208
  %v1210 = vsel %vm1200, %v1207, %v1209
  %v1211 = vsel %vm1199, %v1189, %v1192
  %v1212 = vsel %vm1202, %v1198, 1326507024
  %v1213 = vsel %vm1201, %v1195, %v1212
  %v1214 = vsel %vm1200, %v1211, %v1213
  %v1215 = vshll.u32 %v1175, 8
  %v1216 = vand.u32 %v1215, 65535
  %v1217 = vshrl.u32 %v1215, 16
  %v1218 = vand.u32 %v1214, 65535
  %v1219 = vshrl.u32 %v1214, 16
  %v1220 = vmul.u32 %v1216, %v1218
  %v1221 = vmul.u32 %v1216, %v1219
  %v1222 = vmul.u32 %v1217, %v1218
  %v1223 = vmul.u32 %v1217, %v1219
  %v1224 = vshll.u32 %v1221, 16
  %v1225 = vshrl.u32 %v1221, 16
  %v1226 = vshll.u32 %v1222, 16
  %v1227 = vshrl.u32 %v1222, 16
  %vm1228 = vc.u32 %v1220, %v1224
  %v1229 = vsel %vm1228, 1, 0
  %v1230 = vadd.s32 %v1220, %v1224
  %v1231 = vadd.s32 %v1223, %v1229
  %vm1232 = vc.u32 %v1230, %v1226
  %v1233 = vsel %vm1232, 1, 0
  %v1234 = vadd.s32 %v1230, %v1226
  %v1235 = vadd.s32 %v1231, %v1233
  %v1236 = vadd.s32 %v1235, %v1225
  %v1237 = vadd.s32 %v1236, %v1227
  %v1238 = vand.u32 %v1215, 65535
  %v1239 = vshrl.u32 %v1215, 16
  %v1240 = vand.u32 %v1210, 65535
  %v1241 = vshrl.u32 %v1210, 16
  %v1242 = vmul.u32 %v1238, %v1240
  %v1243 = vmul.u32 %v1238, %v1241
  %v1244 = vmul.u32 %v1239, %v1240
  %v1245 = vmul.u32 %v1239, %v1241
  %v1246 = vshll.u32 %v1243, 16
  %v1247 = vshrl.u32 %v1243, 16
  %v1248 = vshll.u32 %v1244, 16
  %v1249 = vshrl.u32 %v1244, 16
  %vm1250 = vc.u32 %v1242, %v1246
  %v1251 = vsel %vm1250, 1, 0
  %v1252 = vadd.s32 %v1242, %v1246
  %v1253 = vadd.s32 %v1245, %v1251
  %vm1254 = vc.u32 %v1252, %v1248
  %v1255 = vsel %vm1254, 1, 0
  %v1256 = vadd.s32 %v1252, %v1248
  %v1257 = vadd.s32 %v1253, %v1255
  %v1258 = vadd.s32 %v1257, %v1247
  %v1259 = vadd.s32 %v1258, %v1249
  %v1260 = vmul.u32 %v1215, %v1206
  %v1261 = vadd.s32 %v1237, %v1256
  %vm1262 = vc.u32 %v1237, %v1256
  %v1263 = vadd.s32 %v1259, 1
  %v1264 = vsel %vm1262, %v1263, %v1259
  %v1265 = vadd.s32 %v1260, %v1264
  %v1266 = vadd.s32 %v1265, 536870912
  %v1267 = vshrl.u32 %v1266, 30
  %v1268 = vshll.u32 %v1267, 30
  %v1269 = vsub.s32 %v1265, %v1268
  %vm1270 = vcmp.lt.s32.totalorder %v1269, 0
  %v1271 = vsub.s32 0, %v1269
  %v1272 = vsel %vm1270, %v1271, %v1269
  %v1273 = vclz %v1272
  %v1274 = vsub.s32 %v1273, 2
  %vm1275 = vcmp.gt.s32.totalorder 0, %v1274
  %v1276 = vsel %vm1275, 0, %v1274
  %v1277 = vsub.s32 32, %v1276
  %v1278 = vshll.u32 %v1269, %v1276
  %v1279 = vshrl.u32 %v1261, %v1277
  %v1280 = vor.u32 %v1278, %v1279
  %v1281 = vsub.s32 4294967266, %v1276
  %v1282 = vadd.s32 %v1281, 127
  %v1283 = vshll.u32 %v1282, 23
  %v1284 = vor.u32 4788187, %v1283
  %v1285 = vand.u32 2147483647, %v1284
  %v1287 = vcvt.s32.f32 %v1280
  %v1288 = vmul.f32 %v1287, %v1285
  %v1289 = vxor.u32 %v1288, 2147483648
  %v1290 = vsel %vm1169, %v1289, %v1288
  %v1291 = vsub.s32 4, %v1267
  %v1292 = vsel %vm1169, %v1291, %v1267
  %v1293 = vsel %vm1168, %v84, %v1290
  %v1294 = vsel %vm1168, 0, %v1292
  %v1295 = vmul.f32 %v1293, %v1293
  %v1296 = vmul.f32 %v1295, -0.001358992
  %v1297 = vadd.f32 %v1296, 0.041655596
  %v1298 = vmul.f32 %v1295, %v1297
  %v1299 = vadd.f32 %v1298, -0.4999988
  %v1300 = vmul.f32 %v1295, %v1299
  %v1301 = vadd.f32 1.0, %v1300
  %v1302 = vmul.f32 %v1293, %v1293
  %v1303 = vmul.f32 %v1302, -0.00019511016
  %v1304 = vadd.f32 %v1303, 0.008332121
  %v1305 = vmul.f32 %v1302, %v1304
  %v1306 = vadd.f32 %v1305, -0.16666654
  %v1307 = vmul.f32 %v1302, %v1306
  %v1308 = vadd.f32 %v1307, 1.0
  %v1309 = vmul.f32 %v1308, %v1293
  %vm1310 = vweird.f32 %v84
  %v1311 = vand.u32 %v1294, 3
  %vm1312 = vcmp.lt.s32.totalorder %v1311, 2
  %vm1313 = vcmp.eq.s32.totalorder %v1311, 0
  %v1314 = vxor.u32 %v1309, 2147483648
  %v1315 = vsel %vm1313, %v1301, %v1314
  %vm1316 = vcmp.eq.s32.totalorder %v1311, 2
  %v1317 = vxor.u32 %v1301, 2147483648
  %v1318 = vsel %vm1316, %v1317, %v1309
  %v1319 = vsel %vm1312, %v1315, %v1318
  %v1320 = vsel %vm1310, nan, %v1319
  %v1321 = vld [vmem:[%s3] sm:$0xff]
  %v1322 = vld [vmem:[%s3 + $0x8] sm:$0xff]
  %v1323 = vld [vmem:[%s3 + $0x10] sm:$0xff]
  %v1324 = vld [vmem:[%s3 + $0x18] sm:$0xff]
  %v1325 = vld [vmem:[%s4] sm:$0xff]
  %v1326 = vld [vmem:[%s4 + $0x8] sm:$0xff]
  %v1327 = vld [vmem:[%s4 + $0x10] sm:$0xff]
  %v1328 = vld [vmem:[%s4 + $0x18] sm:$0xff]
  %v1329 = vld [vmem:[#allocation2] sm:$0x1]
  %1331 = vset.pattern.permute.xlu0 0
  %1332 = vperm.xlu0 %1331, %v1321
  %v1333 = vpop.permute.xlu0 %1332
  %1336 = vset.pattern.permute.xlu0 0
  %1337 = vperm.xlu0 %1336, %v1322
  %v1338 = vpop.permute.xlu0 %1337
  %1341 = vset.pattern.permute.xlu0 0
  %1342 = vperm.xlu0 %1341, %v1323
  %v1343 = vpop.permute.xlu0 %1342
  %1346 = vset.pattern.permute.xlu0 0
  %1347 = vperm.xlu0 %1346, %v1324
  %v1348 = vpop.permute.xlu0 %1347
  %v1350 = vmul.f32 %v1333, %v239
  %v1351 = vmul.f32 %v1338, %v394
  %v1352 = vmul.f32 %v1343, %v549
  %v1353 = vmul.f32 %v1348, %v704
  %1355 = vset.pattern.permute.xlu0 0
  %1356 = vperm.xlu0 %1355, %v1325
  %v1357 = vpop.permute.xlu0 %1356
  %1360 = vset.pattern.permute.xlu0 0
  %1361 = vperm.xlu0 %1360, %v1326
  %v1362 = vpop.permute.xlu0 %1361
  %1365 = vset.pattern.permute.xlu0 0
  %1366 = vperm.xlu0 %1365, %v1327
  %v1367 = vpop.permute.xlu0 %1366
  %1370 = vset.pattern.permute.xlu0 0
  %1371 = vperm.xlu0 %1370, %v1328
  %v1372 = vpop.permute.xlu0 %1371
  %v1374 = vmul.f32 %v1357, %v858
  %v1375 = vmul.f32 %v1362, %v1012
  %v1376 = vmul.f32 %v1367, %v1166
  %v1377 = vmul.f32 %v1372, %v1320
  %v1378 = vadd.f32 %v1350, %v1374
  %v1379 = vadd.f32 %v1351, %v1375
  %v1380 = vadd.f32 %v1352, %v1376
  %v1381 = vadd.f32 %v1353, %v1377
  %v1382 = vadd.f32 %v1378, %v1379
  %v1383 = vadd.f32 %v1382, %v1380
  %v1384 = vadd.f32 %v1383, %v1381
  %v1385 = vrot.slane %v1384, 4
  %v1386 = vadd.f32 %v1384, %v1385
  %v1387 = vrot.slane %v1386, 2
  %v1388 = vadd.f32 %v1386, %v1387
  %v1389 = vrot.slane %v1388, 1
  %v1390 = vadd.f32 %v1388, %v1389
  %1392 = vset.pattern.permute.xlu0 0
  %1393 = vperm.xlu0 %1392, %v1329
  %v1394 = vpop.permute.xlu0 %1393
  %v1396 = vperm.slane %v1394, 0
  %v1397 = vadd.f32 %v1390, %v1396
  %1398 = vst [vmem:[%s6] sm:$0x1] %v1397
  // Predicated region
  $region26: #{nn_fourier_forward.1} parent=0 // pred_check
    _
  $region27: #{nn_fourier_forward.1} parent=0 // pred_check_branch
    %1400 = sbr.rel (0) target = $region29
  $region28: #{nn_fourier_forward.1} parent=0 // pred_region
    _
  $region29: #{nn_fourier_forward.1} parent=0 // pred_fallthru
    _
  // Predicated region
  $region30: #{nn_fourier_forward.1} parent=0 // pred_check
    _
  $region31: #{nn_fourier_forward.1} parent=0 // pred_check_branch
    %1402 = sbr.rel (0) target = $region33
  $region32: #{nn_fourier_forward.1} parent=0 // pred_region
    _
  $region33: #{nn_fourier_forward.1} parent=0 // pred_fallthru
    _

</llo_original>
